<compile_context>
chip_gen: v7x
topology: tpu7x:2x2x1
jax: 0.10.0
libtpu: 0.0.40
codegen_flags: <defaults>
</compile_context>

<pallas_src>
import jax
import jax.numpy as jnp
from jax.experimental import pallas as pl
from jax.experimental.pallas import tpu as pltpu


_COMPILER_PARAMS = pltpu.CompilerParams(
    dimension_semantics=("arbitrary",),
    vmem_limit_bytes=32 * 1024 * 1024,
)


def _full_spec(shape):
    """BlockSpec covering the whole array (grid=(1,))."""
    n = len(shape)

    def index_map(i):
        return (0,) * n

    return pl.BlockSpec(shape, index_map)


# ----------------------------------------------------------------------------
# Input-projection kernels (hoisted out of the recurrence).
# ----------------------------------------------------------------------------
def _proj_embed_kernel(x_ref, w_ref, b_ref, o_ref):
    # (N, E) @ (E, 8H) + (1, 8H)   -- both directions' W_ih concatenated.
    o_ref[...] = (jnp.dot(x_ref[...], w_ref[...],
                          preferred_element_type=jnp.float32) + b_ref[...])


def _proj_hidden_kernel(xf_ref, xb_ref, w_ref, b_ref, o_ref):
    # (N, H) @ (H, 8H) + (N, H) @ (H, 8H) + (1, 8H)
    # xf/xb are the previous layer's fwd/bwd hidden streams -> no concat needed.
    acc = jnp.dot(xf_ref[...], w_ref[0], preferred_element_type=jnp.float32)
    acc = acc + jnp.dot(xb_ref[...], w_ref[1], preferred_element_type=jnp.float32)
    o_ref[...] = acc + b_ref[...]


def project_inputs_embed(x2d, w_cat, b_cat):
    n, e = x2d.shape
    g8 = w_cat.shape[1]
    return pl.pallas_call(
        _proj_embed_kernel,
        out_shape=jax.ShapeDtypeStruct((n, g8), jnp.float32),
        grid=(1,),
        in_specs=[_full_spec((n, e)), _full_spec((e, g8)), _full_spec((1, g8))],
        out_specs=_full_spec((n, g8)),
        compiler_params=_COMPILER_PARAMS,
    )(x2d, w_cat, b_cat)


def project_inputs_hidden(hf2d, hb2d, w_split, b_cat):
    n, h = hf2d.shape
    g8 = w_split.shape[-1]
    return pl.pallas_call(
        _proj_hidden_kernel,
        out_shape=jax.ShapeDtypeStruct((n, g8), jnp.float32),
        grid=(1,),
        in_specs=[_full_spec((n, h)), _full_spec((n, h)),
                  _full_spec((2, h, g8)), _full_spec((1, g8))],
        out_specs=_full_spec((n, g8)),
        compiler_params=_COMPILER_PARAMS,
    )(hf2d, hb2d, w_split, b_cat)


# ----------------------------------------------------------------------------
# Fused bidirectional LSTM recurrence kernel (whole sequence, both directions).
# ----------------------------------------------------------------------------
def _bilstm_kernel(xp_ref, h0_ref, c0_ref, whh_ref,
                   hf_ref, hb_ref, hfin_ref, cfin_ref):
    seq, batch, _ = xp_ref.shape
    hsz = h0_ref.shape[-1]
    g4 = 4 * hsz

    # Hoist recurrent weights out of the time loop.
    whh_f = whh_ref[0]                      # (H, 4H)
    whh_b = whh_ref[1]                      # (H, 4H)

    # Full-width gate activation: tanh on the 'g' lanes [2H, 3H), sigmoid on
    # the i/f/o lanes (avoids four separate sub-vreg activations).
    lane = jax.lax.broadcasted_iota(jnp.int32, (batch, g4), 1)
    g_lanes = (lane >= 2 * hsz) & (lane < 3 * hsz)

    def cell(gates, c_prev):
        act = jnp.where(g_lanes, jnp.tanh(gates), jax.nn.sigmoid(gates))
        i = act[:, 0:hsz]
        f = act[:, hsz:2 * hsz]
        g = act[:, 2 * hsz:3 * hsz]
        o = act[:, 3 * hsz:4 * hsz]
        c_new = f * c_prev + i * g
        h_new = o * jnp.tanh(c_new)
        return h_new, c_new

    def step(t, carry):
        h_f, c_f, h_b, c_b = carry
        gx_f = xp_ref[t]                    # (B, 8H): fwd gates in lanes [0,4H)
        gx_b = xp_ref[seq - 1 - t]          # (B, 8H): bwd gates in lanes [4H,8H)
        gates_f = gx_f[:, :g4] + jnp.dot(h_f, whh_f,
                                         preferred_element_type=jnp.float32)
        gates_b = gx_b[:, g4:] + jnp.dot(h_b, whh_b,
                                         preferred_element_type=jnp.float32)
        h_f, c_f = cell(gates_f, c_f)
        h_b, c_b = cell(gates_b, c_b)
        hf_ref[t] = h_f                     # forward output at original time t
        hb_ref[seq - 1 - t] = h_b           # backward output in original order
        return h_f, c_f, h_b, c_b

    init = (h0_ref[0], c0_ref[0], h0_ref[1], c0_ref[1])
    h_f, c_f, h_b, c_b = jax.lax.fori_loop(0, seq, step, init, unroll=True)

    # Final states written once, after the loop (no per-step redundant stores).
    hfin_ref[0] = h_f
    hfin_ref[1] = h_b
    cfin_ref[0] = c_f
    cfin_ref[1] = c_b


def bilstm_layer(xp, h0_pair, c0_pair, w_hh):
    """xp: (seq, B, 8H) fused gate pre-activations; h0/c0: (2, B, H); w_hh: (2, H, 4H)."""
    seq, batch, g8 = xp.shape
    hsz = h0_pair.shape[-1]
    out_shape = (
        jax.ShapeDtypeStruct((seq, batch, hsz), jnp.float32),   # fwd h sequence
        jax.ShapeDtypeStruct((seq, batch, hsz), jnp.float32),   # bwd h sequence
        jax.ShapeDtypeStruct((2, batch, hsz), jnp.float32),     # final h (fwd, bwd)
        jax.ShapeDtypeStruct((2, batch, hsz), jnp.float32),     # final c (fwd, bwd)
    )
    return pl.pallas_call(
        _bilstm_kernel,
        out_shape=out_shape,
        grid=(1,),
        in_specs=[_full_spec((seq, batch, g8)),
                  _full_spec((2, batch, hsz)),
                  _full_spec((2, batch, hsz)),
                  _full_spec((2, hsz, 4 * hsz))],
        out_specs=(_full_spec((seq, batch, hsz)),
                   _full_spec((seq, batch, hsz)),
                   _full_spec((2, batch, hsz)),
                   _full_spec((2, batch, hsz))),
        compiler_params=_COMPILER_PARAMS,
    )(xp, h0_pair, c0_pair, w_hh)


# ----------------------------------------------------------------------------
# fc (Linear) + row softmax kernel (only on the rows actually consumed).
# ----------------------------------------------------------------------------
def _fc_softmax_kernel(x_ref, w_ref, b_ref, o_ref):
    logits = (jnp.dot(x_ref[...], w_ref[...],
                      preferred_element_type=jnp.float32) + b_ref[...])
    m = jnp.max(logits, axis=-1, keepdims=True)
    e = jnp.exp(logits - m)
    s = jnp.sum(e, axis=-1, keepdims=True)
    o_ref[...] = e * pl.reciprocal(s, approx=True)


def fc_softmax(x, w, b):
    n, hsz = x.shape
    out = w.shape[1]
    return pl.pallas_call(
        _fc_softmax_kernel,
        out_shape=jax.ShapeDtypeStruct((n, out), jnp.float32),
        grid=(1,),
        in_specs=[_full_spec((n, hsz)), _full_spec((hsz, out)),
                  _full_spec((1, out))],
        out_specs=_full_spec((n, out)),
        compiler_params=_COMPILER_PARAMS,
    )(x, w, b)


# ----------------------------------------------------------------------------
# Full forward (model='lstm').
# ----------------------------------------------------------------------------
def rnn_forward(params, x, hidden):
    batch, seq = x.shape
    hsz = params["hidden_dim"]
    n_layers = params["n_layers"]
    h0_all, c0_all = hidden                              # (n_layers*2, B, H) each

    # TODO(synk): nn.Embedding lookup kept as an XLA gather (no Pallas win at
    # this size); nn.Dropout(0.5) is eval-mode identity (no RNG drop).
    emb = jnp.take(params["embedding"], x, axis=0)       # (B, seq, E)
    emb_tm = jnp.transpose(emb, (1, 0, 2))               # (seq, B, E) time-major

    hf_seq = hb_seq = None
    h_n, c_n = [], []
    for layer in range(n_layers):
        lp = params["lstm"][layer]
        if layer == 0:
            xp_flat = project_inputs_embed(
                emb_tm.reshape(seq * batch, -1), lp["w_ih"], lp["b"])
        else:
            xp_flat = project_inputs_hidden(
                hf_seq.reshape(seq * batch, hsz),
                hb_seq.reshape(seq * batch, hsz),
                lp["w_ih"], lp["b"])
        xp = xp_flat.reshape(seq, batch, 8 * hsz)

        hf_seq, hb_seq, h_fin, c_fin = bilstm_layer(
            xp,
            h0_all[2 * layer:2 * layer + 2],
            c0_all[2 * layer:2 * layer + 2],
            lp["w_hh"])
        h_n.append(h_fin)
        c_n.append(c_fin)

    # Only lstm_out[:, -1, H:2H] (== backward output at the last time step)
    # survives sm.view(batch, -1)[:, -1]; run fc+softmax on just those rows.
    fc_in = hb_seq[seq - 1]                              # (B, H)
    sm = fc_softmax(fc_in, params["fc_w"], params["fc_b"])   # (B, output_size)
    sm_out = sm[:, -1]
    return sm_out, (jnp.concatenate(h_n, axis=0), jnp.concatenate(c_n, axis=0))


# ----------------------------------------------------------------------------
# Deterministic parameter init (shapes equivalent to nn.Embedding/nn.LSTM/nn.Linear,
# stored in the packed layout the kernels consume).
# ----------------------------------------------------------------------------
def init_params(key, vocab_size, output_size, embedding_dim, hidden_dim, n_layers):
    k = 1.0 / float(hidden_dim) ** 0.5
    keys = iter(jax.random.split(key, 4 + n_layers * 6))
    params = {
        "hidden_dim": hidden_dim,
        "n_layers": n_layers,
        "embedding": jax.random.normal(next(keys), (vocab_size, embedding_dim),
                                       jnp.float32),
        "fc_w": jax.random.uniform(next(keys), (hidden_dim, output_size),
                                   jnp.float32, -k, k),
        "fc_b": jax.random.uniform(next(keys), (1, output_size),
                                   jnp.float32, -k, k),
        "lstm": [],
    }
    for layer in range(n_layers):
        in_dim = embedding_dim if layer == 0 else 2 * hidden_dim
        w_ih_f = jax.random.uniform(next(keys), (in_dim, 4 * hidden_dim),
                                    jnp.float32, -k, k)
        w_ih_b = jax.random.uniform(next(keys), (in_dim, 4 * hidden_dim),
                                    jnp.float32, -k, k)
        w_hh_f = jax.random.uniform(next(keys), (hidden_dim, 4 * hidden_dim),
                                    jnp.float32, -k, k)
        w_hh_b = jax.random.uniform(next(keys), (hidden_dim, 4 * hidden_dim),
                                    jnp.float32, -k, k)
        b_f = jax.random.uniform(next(keys), (1, 4 * hidden_dim),
                                 jnp.float32, -k, k)
        b_b = jax.random.uniform(next(keys), (1, 4 * hidden_dim),
                                 jnp.float32, -k, k)

        w_ih_cat = jnp.concatenate([w_ih_f, w_ih_b], axis=1)        # (in_dim, 8H)
        if layer == 0:
            w_ih_store = w_ih_cat                                   # (E, 8H)
        else:
            # Split along the input dim: [0] = rows hit by the previous layer's
            # fwd features, [1] = rows hit by its bwd features.
            w_ih_store = jnp.stack([w_ih_cat[:hidden_dim],
                                    w_ih_cat[hidden_dim:]], axis=0)  # (2, H, 8H)
        params["lstm"].append({
            "w_ih": w_ih_store,
            "w_hh": jnp.stack([w_hh_f, w_hh_b], axis=0),            # (2, H, 4H)
            "b": jnp.concatenate([b_f, b_b], axis=1),               # (1, 8H)
        })
    return params


# ----------------------------------------------------------------------------
# Pure-JAX reference (correctness check of the Pallas path).
# ----------------------------------------------------------------------------
def _layer_ref_weights(lp, hidden_dim):
    h4 = 4 * hidden_dim
    w_ih = lp["w_ih"]
    if w_ih.ndim == 3:                                   # (2, H, 8H) -> (2H, 8H)
        w_ih = jnp.concatenate([w_ih[0], w_ih[1]], axis=0)
    w_ih_f, w_ih_b = w_ih[:, :h4], w_ih[:, h4:]
    b_f, b_b = lp["b"][:, :h4], lp["b"][:, h4:]
    return (w_ih_f, lp["w_hh"][0], b_f), (w_ih_b, lp["w_hh"][1], b_b)


def _ref_lstm_dir(x_tm, h0, c0, w_ih, w_hh, b):
    H = h0.shape[-1]

    def step(carry, x_t):
        h, c = carry
        gates = x_t @ w_ih + h @ w_hh + b[0]
        i = jax.nn.sigmoid(gates[:, 0:H])
        f = jax.nn.sigmoid(gates[:, H:2 * H])
        g = jnp.tanh(gates[:, 2 * H:3 * H])
        o = jax.nn.sigmoid(gates[:, 3 * H:])
        c = f * c + i * g
        h = o * jnp.tanh(c)
        return (h, c), h

    (hT, cT), hs = jax.lax.scan(step, (h0, c0), x_tm)
    return hs, hT, cT


def ref_forward(params, x, hidden):
    batch, _ = x.shape
    H = params["hidden_dim"]
    emb = jnp.take(params["embedding"], x, axis=0)
    layer_in = jnp.transpose(emb, (1, 0, 2))
    h0_all, c0_all = hidden
    h_n, c_n = [], []
    for layer in range(params["n_layers"]):
        (w_ih_f, w_hh_f, b_f), (w_ih_b, w_hh_b, b_b) = _layer_ref_weights(
            params["lstm"][layer], H)
        hf, hfT, cfT = _ref_lstm_dir(layer_in, h0_all[2 * layer],
                                     c0_all[2 * layer], w_ih_f, w_hh_f, b_f)
        hb_rev, hbT, cbT = _ref_lstm_dir(jnp.flip(layer_in, 0),
                                         h0_all[2 * layer + 1],
                                         c0_all[2 * layer + 1],
                                         w_ih_b, w_hh_b, b_b)
        h_n += [hfT, hbT]
        c_n += [cfT, cbT]
        layer_in = jnp.concatenate([hf, jnp.flip(hb_rev, 0)], axis=-1)
    model_out = jnp.transpose(layer_in, (1, 0, 2)).reshape(-1, H)
    logits = model_out @ params["fc_w"] + params["fc_b"]
    sm = jax.nn.softmax(logits, axis=-1)
    sm_out = sm.reshape(batch, -1)[:, -1]
    return sm_out, (jnp.stack(h_n, 0), jnp.stack(c_n, 0))


if __name__ == "__main__":
    vocab_size, output_size = 32, 4
    embedding_dim, hidden_dim, n_layers = 16, 32, 2
    batch, seq = 2, 8

    key = jax.random.PRNGKey(0)
    kp, kx = jax.random.split(key)
    params = init_params(kp, vocab_size, output_size, embedding_dim,
                         hidden_dim, n_layers)

    x = jax.random.randint(kx, (batch, seq), 0, vocab_size, jnp.int32)
    # init_hidden(batch): zeros of shape (n_layers*2, batch, hidden_dim)
    h0 = jnp.zeros((n_layers * 2, batch, hidden_dim), jnp.float32)
    c0 = jnp.zeros((n_layers * 2, batch, hidden_dim), jnp.float32)

    sm_out, (h_n, c_n) = rnn_forward(params, x, (h0, c0))
    sm_out = jax.block_until_ready(sm_out)
    jax.block_until_ready((h_n, c_n))

    ref_sm, (ref_h, ref_c) = ref_forward(params, x, (h0, c0))

    assert sm_out.shape == (batch,)
    assert h_n.shape == (n_layers * 2, batch, hidden_dim)
    assert c_n.shape == (n_layers * 2, batch, hidden_dim)
    assert jnp.allclose(h_n, ref_h, atol=5e-5), (h_n, ref_h)
    assert jnp.allclose(c_n, ref_c, atol=5e-5), (c_n, ref_c)
    # The softmax denominator uses the EUP approximate reciprocal -> slightly
    # looser tolerance on the final probabilities.
    assert jnp.allclose(sm_out, ref_sm, atol=1e-3), (sm_out, ref_sm)

    print("KERNEL_OK")
</pallas_src>

<mosaic_0001>
module attributes {stable_mosaic.version = 11 : i64} {
  func.func @_proj_embed_kernel(%arg0: i32, %arg1: memref<16x16xf32, #tpu.memory_space<vmem>>, %arg2: memref<16x256xf32, #tpu.memory_space<vmem>>, %arg3: memref<1x256xf32, #tpu.memory_space<vmem>>, %arg4: memref<16x256xf32, #tpu.memory_space<vmem>>) attributes {dimension_semantics = [#tpu.dimension_semantics<arbitrary>], iteration_bounds = array<i64: 1>, scalar_prefetch = 0 : i64, scratch_operands = 0 : i64, tpu.core_type = #tpu.core_type<tc>, window_params = [{pipeline_mode = #tpu.pipeline_mode<synchronous>, transform_indices = @transform_0, window_bounds = array<i64: 16, 16>}, {pipeline_mode = #tpu.pipeline_mode<synchronous>, transform_indices = @transform_1, window_bounds = array<i64: 16, 256>}, {pipeline_mode = #tpu.pipeline_mode<synchronous>, transform_indices = @transform_2, window_bounds = array<i64: 1, 256>}, {pipeline_mode = #tpu.pipeline_mode<synchronous>, transform_indices = @transform_3, window_bounds = array<i64: 16, 256>}]} {
    %c0 = arith.constant 0 : index
    %c0_0 = arith.constant 0 : index
    %0 = vector.load %arg1[%c0, %c0_0] : memref<16x16xf32, #tpu.memory_space<vmem>>, vector<16x16xf32>
    %c0_1 = arith.constant 0 : index
    %c0_2 = arith.constant 0 : index
    %1 = vector.load %arg2[%c0_1, %c0_2] : memref<16x256xf32, #tpu.memory_space<vmem>>, vector<16x256xf32>
    %cst = arith.constant dense<0.000000e+00> : vector<16x256xf32>
    %2 = tpu.matmul %0, %1, %cst {dimension_numbers = #tpu.dot_dimension_numbers<[1], [0], [0], [1], [0, 0, 1, 1], [], []>} : vector<16x16xf32>, vector<16x256xf32>, vector<16x256xf32> -> vector<16x256xf32>
    %c0_3 = arith.constant 0 : index
    %c0_4 = arith.constant 0 : index
    %3 = vector.load %arg3[%c0_3, %c0_4] : memref<1x256xf32, #tpu.memory_space<vmem>>, vector<1x256xf32>
    %4 = vector.broadcast %3 : vector<1x256xf32> to vector<16x256xf32>
    %5 = arith.addf %2, %4 : vector<16x256xf32>
    %c0_5 = arith.constant 0 : index
    %c0_6 = arith.constant 0 : index
    %6 = vector.load %arg4[%c0_5, %c0_6] : memref<16x256xf32, #tpu.memory_space<vmem>>, vector<16x256xf32>
    tpu.vector_store %arg4[%c0_5, %c0_6], %5 {strides = array<i32>} : memref<16x256xf32, #tpu.memory_space<vmem>>, vector<16x256xf32>,
    return
  }
  func.func @transform_0(%arg0: i32) -> (i32, i32) {
    %c0_i32 = arith.constant 0 : i32
    %c0_i32_0 = arith.constant 0 : i32
    %c0_i32_1 = arith.constant 0 : i32
    return %c0_i32, %c0_i32_0 : i32, i32
  }
  func.func @transform_1(%arg0: i32) -> (i32, i32) {
    %c0_i32 = arith.constant 0 : i32
    %c0_i32_0 = arith.constant 0 : i32
    %c0_i32_1 = arith.constant 0 : i32
    return %c0_i32, %c0_i32_0 : i32, i32
  }
  func.func @transform_2(%arg0: i32) -> (i32, i32) {
    %c0_i32 = arith.constant 0 : i32
    %c0_i32_0 = arith.constant 0 : i32
    %c0_i32_1 = arith.constant 0 : i32
    return %c0_i32, %c0_i32_0 : i32, i32
  }
  func.func @transform_3(%arg0: i32) -> (i32, i32) {
    %c0_i32 = arith.constant 0 : i32
    %c0_i32_0 = arith.constant 0 : i32
    %c0_i32_1 = arith.constant 0 : i32
    return %c0_i32, %c0_i32_0 : i32, i32
  }
}

</mosaic_0001>

<llo_original>
// kernel: tpu_custom_call.1
$region0: #{tpu_custom_call.1}
  #allocation0 [shape = 'u32[]', space=smem, size = 0x4, offset = 0x4, fixed_abs, tag = 'smem constant byte address 0x4 - core index']
  #allocation1 [shape = 'u32[144,128]{1,0:T(1,128)}', space=vmem, size = 0x12000, scoped, tag = 'internal scratch']
  %s0 = inlined_call_operand.hbm [shape: f32[16,16], index: 0, kind: input, shape index: {}]
  %s1 = inlined_call_operand.hbm [shape: f32[16,256], index: 1, kind: input, shape index: {}]
  %s2 = inlined_call_operand.vmem [shape: f32[1,256], index: 2, kind: input, shape index: {}]
  %s3 = inlined_call_operand.hbm [shape: f32[16,256], index: 3, kind: output, shape index: {}]
  %s4 = sld [smem:[#allocation0]]
  $region30: #{tpu_custom_call.1} parent=0
    _
  %s6 = ssub.s32 1, %s4
  %s7 = scalar_select 0, %s6, %s4
  $region1: #{tpu_custom_call.1} parent=0
    #allocation2 [shape = 'u8[8192]{0}', space=vmem, size = 0x2000, scoped, tag = 'input window, operand 0, single buffered']
    #allocation3 [shape = 's32[1]{0}', space=sflag, size = 0x4, scoped, tag = 'scoped memory for tpu_custom_call.1']
    #allocation4 [shape = 's32[1]{0}', space=sflag, size = 0x4, scoped, tag = 'scoped memory for tpu_custom_call.1']
    #allocation5 [shape = 'u8[16384]{0}', space=vmem, size = 0x4000, scoped, tag = 'input window, operand 1, single buffered']
    #allocation6 [shape = 's32[1]{0}', space=sflag, size = 0x4, scoped, tag = 'scoped memory for tpu_custom_call.1']
    #allocation7 [shape = 'u8[16384]{0}', space=vmem, size = 0x4000, scoped, tag = 'output window, operand 0, single buffered']
    %8 = vsyncpa [#allocation3], 0
    %9 = vsyncpa [#allocation6], 0
    %10 = vsyncpa [#allocation4], 0
    // Predicated region
    $region2: #{tpu_custom_call.1} parent=1 // pred_check
      _
    $region3: #{tpu_custom_call.1} parent=1 // pred_check_branch
      %12 = sbr.rel (0) target = $region5
    $region4: #{tpu_custom_call.1} parent=1 // pred_region
      %s14 = ssub.s32 256, 256
      %15 = vsyncadd [#allocation3], %s14
      %s16 = sshll.u32 [#allocation2], 4
      %s17 = int_to_ptr.vmem [resolvable:$true] %s16
      %22 = dma.hbm_to_vmem [thread:$0]  %s0, 256, %s17, [#allocation3], 128, 128, 8
    $region5: #{tpu_custom_call.1} parent=1 // pred_fallthru
      _
    // Predicated region
    $region6: #{tpu_custom_call.1} parent=1 // pred_check
      _
    $region7: #{tpu_custom_call.1} parent=1 // pred_check_branch
      %24 = sbr.rel (0) target = $region9
    $region8: #{tpu_custom_call.1} parent=1 // pred_region
      %s26 = ssub.s32 512, 512
      %27 = vsyncadd [#allocation6], %s26
      %s28 = sshll.u32 [#allocation5], 4
      %s29 = int_to_ptr.vmem [resolvable:$true] %s28
      %34 = dma.hbm_to_vmem [thread:$0]  %s1, 512, %s29, [#allocation6], 256, 256, 16
    $region9: #{tpu_custom_call.1} parent=1 // pred_fallthru
      _
    // Predicated region
    $region10: #{tpu_custom_call.1} parent=1 // pred_check
      _
    $region11: #{tpu_custom_call.1} parent=1 // pred_check_branch
      %36 = sbr.rel (0) target = $region13
    $region12: #{tpu_custom_call.1} parent=1 // pred_region
      _
    $region13: #{tpu_custom_call.1} parent=1 // pred_fallthru
      _
    // Predicated region
    $region14: #{tpu_custom_call.1} parent=1 // pred_check
      _
    $region15: #{tpu_custom_call.1} parent=1 // pred_check_branch
      %38 = sbr.rel (0) target = $region17
    $region16: #{tpu_custom_call.1} parent=1 // pred_region
      %39 = dma.done [#allocation3], 256
    $region17: #{tpu_custom_call.1} parent=1 // pred_fallthru
      _
    // Predicated region
    $region18: #{tpu_custom_call.1} parent=1 // pred_check
      _
    $region19: #{tpu_custom_call.1} parent=1 // pred_check_branch
      %41 = sbr.rel (0) target = $region21
    $region20: #{tpu_custom_call.1} parent=1 // pred_region
      %42 = dma.done [#allocation6], 512
    $region21: #{tpu_custom_call.1} parent=1 // pred_fallthru
      _
    %v43 = vld [vmem:[#allocation2] sm:$0xff]
    %v44 = vld [vmem:[#allocation2 + $0x8] sm:$0xff]
    %v45 = vld [vmem:[#allocation5] sm:$0xff]
    %v46 = vld [vmem:[#allocation5 + $0x8] sm:$0xff]
    %v47 = vld [vmem:[#allocation5 + $0x10] sm:$0xff]
    %v48 = vld [vmem:[#allocation5 + $0x18] sm:$0xff]
    %v49 = vld [vmem:[%s2] sm:$0x3]
    %v51 = vlaneseq
    %v52 = vshrl.u32 %v51, 7
    %v53 = vsub.s32 0, %v52
    %v54 = vrot.slane %v49, %v53
    %v55 = vlaneseq
    %v56 = vshrl.u32 %v55, 7
    %v57 = vsub.s32 1, %v56
    %v58 = vrot.slane %v49, %v57
    %vm61 = vcmask 130048
    %v63 = vsel %vm61, %v43, 0
    %v66 = vsel %vm61, %v44, 0
    %68 = vmatprep.subr.mxu0 %v46
    %69 = vmatpush1.msra.mxu0 %v45
    %70 = vmatprep.subr.mxu0 %v48
    %71 = vmatpush1.msra.mxu0 %v47
    %72 = vmatprep.subr.mxu0 0.0
    %73 = vmatpush1.msra.mxu0 0.0
    %74 = vmatprep.subr.mxu0 0.0
    %75 = vmatpush1.msra.mxu0 0.0
    %76 = vmatprep.subr.mxu0 0.0
    %77 = vmatpush1.msra.mxu0 0.0
    %78 = vmatprep.subr.mxu0 0.0
    %79 = vmatpush1.msra.mxu0 0.0
    %80 = vmatprep.subr.mxu0 0.0
    %81 = vmatpush1.msra.mxu0 0.0
    %82 = vmatprep.subr.mxu0 0.0
    %83 = vmatpush1.msra.mxu0 0.0
    %84 = vmatprep.subr.mxu0 0.0
    %85 = vmatpush1.msra.mxu0 0.0
    %86 = vmatprep.subr.mxu0 0.0
    %87 = vmatpush1.msra.mxu0 0.0
    %88 = vmatprep.subr.mxu0 0.0
    %89 = vmatpush1.msra.mxu0 0.0
    %90 = vmatprep.subr.mxu0 0.0
    %91 = vmatpush1.msra.mxu0 0.0
    %92 = vmatprep.subr.mxu0 0.0
    %93 = vmatpush1.msra.mxu0 0.0
    %94 = vmatprep.subr.mxu0 0.0
    %95 = vmatpush1.msra.mxu0 0.0
    %96 = vmatprep.subr.mxu0 0.0
    %97 = vmatpush1.msra.mxu0 0.0
    %98 = vmatprep.subr.mxu0 0.0
    %99 = vmatpush1.msra.mxu0 0.0
    %100 = vmatprep.subr.mxu0 0.0
    %101 = vmatpush1.msra.mxu0 0.0
    %102 = vmatprep.subr.mxu0 0.0
    %103 = vmatpush1.msra.mxu0 0.0
    %104 = vmatprep.subr.mxu0 0.0
    %105 = vmatpush1.msra.mxu0 0.0
    %106 = vmatprep.subr.mxu0 0.0
    %107 = vmatpush1.msra.mxu0 0.0
    %108 = vmatprep.subr.mxu0 0.0
    %109 = vmatpush1.msra.mxu0 0.0
    %110 = vmatprep.subr.mxu0 0.0
    %111 = vmatpush1.msra.mxu0 0.0
    %112 = vmatprep.subr.mxu0 0.0
    %113 = vmatpush1.msra.mxu0 0.0
    %114 = vmatprep.subr.mxu0 0.0
    %115 = vmatpush1.msra.mxu0 0.0
    %116 = vmatprep.subr.mxu0 0.0
    %117 = vmatpush1.msra.mxu0 0.0
    %118 = vmatprep.subr.mxu0 0.0
    %119 = vmatpush1.msra.mxu0 0.0
    %120 = vmatprep.subr.mxu0 0.0
    %121 = vmatpush1.msra.mxu0 0.0
    %122 = vmatprep.subr.mxu0 0.0
    %123 = vmatpush1.msra.mxu0 0.0
    %124 = vmatprep.subr.mxu0 0.0
    %125 = vmatpush1.msra.mxu0 0.0
    %126 = vmatprep.subr.mxu0 0.0
    %127 = vmatpush1.msra.mxu0 0.0
    %128 = vmatprep.subr.mxu0 0.0
    %129 = vmatpush1.msra.mxu0 0.0
    %130 = vmatprep.subr.mxu0 0.0
    %131 = vmatpush1.msra.mxu0 0.0
    %132 = vmatprep.mubr.f32.mxu0 0.0
    %133 = vmatmul.mubr.f32.gmra.mrb[0].mxu0 %v63
    %v134 = vpop.f32.mrb[0].mxu0
    %v135 = vadd.f32 %v54, %v134
    %v136 = vpop.f32.mrb[0].mxu0
    %v137 = vadd.f32 %v58, %v136
    %138 = vmatprep.mubr.f32.mxu0 0.0
    %139 = vmatmul.mubr.f32.gmra.mrb[0].mxu0 %v66
    %v140 = vpop.f32.mrb[0].mxu0
    %v141 = vadd.f32 %v54, %v140
    %v142 = vpop.f32.mrb[0].mxu0
    %v143 = vadd.f32 %v58, %v142
    %144 = vdwg.mxu0
    %145 = vst [vmem:[#allocation7] sm:$0xff] %v135
    %146 = vst [vmem:[#allocation7 + $0x8] sm:$0xff] %v137
    %147 = vst [vmem:[#allocation7 + $0x10] sm:$0xff] %v141
    %148 = vst [vmem:[#allocation7 + $0x18] sm:$0xff] %v143
    // Predicated region
    $region22: #{tpu_custom_call.1} parent=1 // pred_check
      _
    $region23: #{tpu_custom_call.1} parent=1 // pred_check_branch
      %150 = sbr.rel (0) target = $region25
    $region24: #{tpu_custom_call.1} parent=1 // pred_region
      %s152 = ssub.s32 512, 512
      %153 = vsyncadd [#allocation4], %s152
      %s154 = sshll.u32 [#allocation7], 4
      %s155 = int_to_ptr.vmem [resolvable:$true] %s154
      %160 = dma.vmem_to_hbm [thread:$0]  %s155, 512, %s3, [#allocation4], 256, 256, 16
    $region25: #{tpu_custom_call.1} parent=1 // pred_fallthru
      _
    // Predicated region
    $region26: #{tpu_custom_call.1} parent=1 // pred_check
      _
    $region27: #{tpu_custom_call.1} parent=1 // pred_check_branch
      %162 = sbr.rel (0) target = $region29
    $region28: #{tpu_custom_call.1} parent=1 // pred_region
      %163 = dma.done [#allocation4], 512
    $region29: #{tpu_custom_call.1} parent=1 // pred_fallthru
      _
    %164 = vsyncpa [#allocation3], 1
    %165 = vsyncpa [#allocation6], 1
    %166 = vsyncpa [#allocation4], 1

</llo_original>
